<compile_context>
chip_gen: v7x
topology: tpu7x:2x2x1
jax: 0.10.0
libtpu: 0.0.40
codegen_flags: <defaults>
</compile_context>

<pallas_src>
import functools

import jax
import jax.numpy as jnp
from jax import lax
from jax.experimental import pallas as pl
from jax.experimental.pallas import tpu as pltpu


T_BLK = 128  # one time block = one 128-lane group


def _gae_kernel(r_ref, tm_ref, v_ref, nv_ref,     # inputs  (b_tile, T_BLK) f32
                adv_ref, ret_ref,                 # outputs (b_tile, T_BLK) f32
                carry_ref,                        # VMEM scratch (b_tile, 1) f32
                *, gamma, gl):
    # Reset the cross-block gae carry at the first grid step along T; the
    # reversed index_map maps that step to the LAST (latest-in-time) block.
    @pl.when(pl.program_id(1) == 0)
    def _():
        carry_ref[...] = jnp.zeros_like(carry_ref)

    bt, L = r_ref.shape

    # Per-step affine map:  gae_t = off_t + coef_t * gae_{t+1}
    not_done = 1.0 - tm_ref[...]
    coef = gl * not_done                                              # A_t
    off = r_ref[...] + gamma * nv_ref[...] * not_done - v_ref[...]    # B_t (delta)

    # Hillis-Steele suffix scan (backward in time) along the lane axis.
    # Compose window [t, t+s) with [t+s, t+2s):
    #     B[t] += A[t] * B[t+s] ;  A[t] *= A[t+s]
    # Positions with t+s >= L compose with the identity map (A=1, B=0).
    col = lax.broadcasted_iota(jnp.int32, (bt, L), 1)
    s = 1
    while s < L:                                   # static unroll: log2(L) rounds
        a_sh = pltpu.roll(coef, L - s, axis=1)     # a_sh[t] = coef[(t + s) % L]
        b_sh = pltpu.roll(off, L - s, axis=1)
        valid = col < (L - s)
        a_sh = jnp.where(valid, a_sh, 1.0)
        b_sh = jnp.where(valid, b_sh, 0.0)
        off = off + coef * b_sh
        coef = coef * a_sh
        s *= 2

    # Apply the carry (gae of the timestep just after this block), store the
    # whole lane-dense block once, and fold returns into the same pass.
    gae = off + coef * carry_ref[...]
    adv_ref[...] = gae
    ret_ref[...] = gae + v_ref[...]
    carry_ref[...] = gae[:, 0:1]        # gae at this block's earliest timestep


def gae_pallas(reward, terminated, value, next_value, gamma, lmbda):
    """Inputs [B, T] (PyTorch convention). Returns (advantages, returns) [B, T]."""
    B, T = reward.shape
    f32 = jnp.float32
    gamma = float(gamma)
    lmbda = float(lmbda)

    # Batch on sublanes (multiple of 8); time on lanes in blocks of 128.
    b_rounded = ((B + 7) // 8) * 8
    # Cap the batch tile so VMEM stays tiny and big batches give >=2 tiles
    # (feeds both TensorCores on v7x via the "parallel" batch axis).
    b_tile = b_rounded if b_rounded <= 256 else 256
    b_pad = ((b_rounded + b_tile - 1) // b_tile) * b_tile
    t_pad = ((T + T_BLK - 1) // T_BLK) * T_BLK
    n_b = b_pad // b_tile
    n_t = t_pad // T_BLK

    def prep(x):
        # Zero padding is GAE-neutral: padded steps have delta=0 and the carry
        # starts at 0; padded batch rows are sliced off below.
        return jnp.pad(x.astype(f32), ((0, b_pad - B), (0, t_pad - T)))

    r_p, tm_p, v_p, nv_p = map(prep, (reward, terminated, value, next_value))

    idx = lambda b, t: (b, n_t - 1 - t)            # iterate time blocks in reverse
    blk = pl.BlockSpec((b_tile, T_BLK), idx)
    kernel = functools.partial(_gae_kernel, gamma=gamma, gl=gamma * lmbda)

    adv_p, ret_p = pl.pallas_call(
        kernel,
        out_shape=(jax.ShapeDtypeStruct((b_pad, t_pad), f32),
                   jax.ShapeDtypeStruct((b_pad, t_pad), f32)),
        grid_spec=pltpu.PrefetchScalarGridSpec(
            num_scalar_prefetch=0,
            grid=(n_b, n_t),
            in_specs=[blk, blk, blk, blk],
            out_specs=(blk, blk),
            scratch_shapes=[pltpu.VMEM((b_tile, 1), f32)],  # gae carry across T blocks
        ),
        compiler_params=pltpu.CompilerParams(
            dimension_semantics=("parallel", "arbitrary")),
    )(r_p, tm_p, v_p, nv_p)

    return adv_p[:B, :T], ret_p[:B, :T]


def gae_ref(reward, terminated, value, next_value, gamma, lmbda):
    """Pure-JAX reference (mirrors the PyTorch loop) for verification."""
    reward = reward.astype(jnp.float32)
    value = value.astype(jnp.float32)
    next_value = next_value.astype(jnp.float32)
    not_done = 1.0 - terminated.astype(jnp.float32)
    delta = reward + gamma * next_value * not_done - value

    def step(gae, inp):
        d, nd = inp
        gae = d + gamma * lmbda * nd * gae
        return gae, gae

    _, adv_rev = lax.scan(step, jnp.zeros(reward.shape[0], jnp.float32),
                          (delta.T[::-1], not_done.T[::-1]))
    adv = adv_rev[::-1].T
    return adv, adv + value


if __name__ == "__main__":
    gamma, lmbda = 0.99, 0.95
    key = jax.random.PRNGKey(0)

    def make_inputs(key, B, T):
        k1, k2, k3, k4, key = jax.random.split(key, 5)
        reward = jax.random.normal(k1, (B, T), dtype=jnp.float32)
        terminated = (jax.random.uniform(k2, (B, T)) < 0.2).astype(jnp.float32)
        value = jax.random.normal(k3, (B, T), dtype=jnp.float32)
        next_value = jax.random.normal(k4, (B, T), dtype=jnp.float32)
        return (reward, terminated, value, next_value), key

    # (2, 8): primary small shape matching the module spec.
    # (3, 13): exercises B/T padding paths.
    # (300, 300): exercises multi-block T (cross-block gae carry via reversed
    #             grid axis) and multi-tile batch grid.
    for (B, T) in [(2, 8), (3, 13), (300, 300)]:
        args, key = make_inputs(key, B, T)
        adv, ret = gae_pallas(*args, gamma, lmbda)
        jax.block_until_ready((adv, ret))
        adv_r, ret_r = gae_ref(*args, gamma, lmbda)
        assert jnp.allclose(adv, adv_r, atol=1e-4, rtol=1e-4), ("adv mismatch", B, T)
        assert jnp.allclose(ret, ret_r, atol=1e-4, rtol=1e-4), ("ret mismatch", B, T)

    print("KERNEL_OK")
</pallas_src>

<mosaic_0001>
module attributes {stable_mosaic.version = 11 : i64} {
  func.func @_gae_kernel(%arg0: i32, %arg1: i32, %arg2: memref<8x128xf32, #tpu.memory_space<vmem>>, %arg3: memref<8x128xf32, #tpu.memory_space<vmem>>, %arg4: memref<8x128xf32, #tpu.memory_space<vmem>>, %arg5: memref<8x128xf32, #tpu.memory_space<vmem>>, %arg6: memref<8x128xf32, #tpu.memory_space<vmem>>, %arg7: memref<8x128xf32, #tpu.memory_space<vmem>>, %arg8: memref<8x1xf32, #tpu.memory_space<vmem>>) attributes {dimension_semantics = [#tpu.dimension_semantics<parallel>, #tpu.dimension_semantics<arbitrary>], iteration_bounds = array<i64: 1, 1>, scalar_prefetch = 0 : i64, scratch_operands = 1 : i64, tpu.core_type = #tpu.core_type<tc>, window_params = [{transform_indices = @transform_0, window_bounds = array<i64: 8, 128>}, {transform_indices = @transform_1, window_bounds = array<i64: 8, 128>}, {transform_indices = @transform_2, window_bounds = array<i64: 8, 128>}, {transform_indices = @transform_3, window_bounds = array<i64: 8, 128>}, {transform_indices = @transform_4, window_bounds = array<i64: 8, 128>}, {transform_indices = @transform_5, window_bounds = array<i64: 8, 128>}]} {
    %c0_i32 = arith.constant 0 : i32
    %0 = arith.cmpi eq, %arg1, %c0_i32 : i32
    %1 = arith.extui %0 : i1 to i32
    %c0_i32_0 = arith.constant 0 : i32
    %2 = arith.cmpi ne, %1, %c0_i32_0 : i32
    scf.if %2 {
      %cst_48 = arith.constant 0.000000e+00 : f32
      %104 = vector.broadcast %cst_48 : f32 to vector<8x1xf32>
      %c0_49 = arith.constant 0 : index
      %c0_50 = arith.constant 0 : index
      %105 = vector.load %arg8[%c0_49, %c0_50] : memref<8x1xf32, #tpu.memory_space<vmem>>, vector<8x1xf32>
      tpu.vector_store %arg8[%c0_49, %c0_50], %104 {strides = array<i32>} : memref<8x1xf32, #tpu.memory_space<vmem>>, vector<8x1xf32>,
    } else {
    }
    %c0 = arith.constant 0 : index
    %c0_1 = arith.constant 0 : index
    %3 = vector.load %arg3[%c0, %c0_1] : memref<8x128xf32, #tpu.memory_space<vmem>>, vector<8x128xf32>
    %cst = arith.constant 1.000000e+00 : f32
    %4 = vector.broadcast %cst : f32 to vector<8x128xf32>
    %5 = arith.subf %4, %3 : vector<8x128xf32>
    %cst_2 = arith.constant 9.405000e-01 : f32
    %6 = vector.broadcast %cst_2 : f32 to vector<8x128xf32>
    %7 = arith.mulf %6, %5 : vector<8x128xf32>
    %c0_3 = arith.constant 0 : index
    %c0_4 = arith.constant 0 : index
    %8 = vector.load %arg2[%c0_3, %c0_4] : memref<8x128xf32, #tpu.memory_space<vmem>>, vector<8x128xf32>
    %c0_5 = arith.constant 0 : index
    %c0_6 = arith.constant 0 : index
    %9 = vector.load %arg5[%c0_5, %c0_6] : memref<8x128xf32, #tpu.memory_space<vmem>>, vector<8x128xf32>
    %cst_7 = arith.constant 9.900000e-01 : f32
    %10 = vector.broadcast %cst_7 : f32 to vector<8x128xf32>
    %11 = arith.mulf %10, %9 : vector<8x128xf32>
    %12 = arith.mulf %11, %5 : vector<8x128xf32>
    %13 = arith.addf %8, %12 : vector<8x128xf32>
    %c0_8 = arith.constant 0 : index
    %c0_9 = arith.constant 0 : index
    %14 = vector.load %arg4[%c0_8, %c0_9] : memref<8x128xf32, #tpu.memory_space<vmem>>, vector<8x128xf32>
    %15 = arith.subf %13, %14 : vector<8x128xf32>
    %16 = tpu.iota {dimensions = array<i32: 1>} : vector<8x128xi32>
    %c127_i32 = arith.constant 127 : i32
    %17 = tpu.dynamic_rotate %7 by %c127_i32 dim 1 : vector<8x128xf32>, i32 -> vector<8x128xf32>
    %c127_i32_10 = arith.constant 127 : i32
    %18 = tpu.dynamic_rotate %15 by %c127_i32_10 dim 1 : vector<8x128xf32>, i32 -> vector<8x128xf32>
    %c127_i32_11 = arith.constant 127 : i32
    %19 = vector.broadcast %c127_i32_11 : i32 to vector<8x128xi32>
    %20 = arith.cmpi slt, %16, %19 : vector<8x128xi32>
    %cst_12 = arith.constant 1.000000e+00 : f32
    %21 = vector.broadcast %cst_12 : f32 to vector<8x128xf32>
    %22 = arith.select %20, %17, %21 : vector<8x128xi1>, vector<8x128xf32>
    %cst_13 = arith.constant 0.000000e+00 : f32
    %23 = vector.broadcast %cst_13 : f32 to vector<8x128xf32>
    %24 = arith.select %20, %18, %23 : vector<8x128xi1>, vector<8x128xf32>
    %25 = arith.mulf %7, %24 : vector<8x128xf32>
    %26 = arith.addf %15, %25 : vector<8x128xf32>
    %27 = arith.mulf %7, %22 : vector<8x128xf32>
    %c126_i32 = arith.constant 126 : i32
    %28 = tpu.dynamic_rotate %27 by %c126_i32 dim 1 : vector<8x128xf32>, i32 -> vector<8x128xf32>
    %c126_i32_14 = arith.constant 126 : i32
    %29 = tpu.dynamic_rotate %26 by %c126_i32_14 dim 1 : vector<8x128xf32>, i32 -> vector<8x128xf32>
    %c126_i32_15 = arith.constant 126 : i32
    %30 = vector.broadcast %c126_i32_15 : i32 to vector<8x128xi32>
    %31 = arith.cmpi slt, %16, %30 : vector<8x128xi32>
    %cst_16 = arith.constant 1.000000e+00 : f32
    %32 = vector.broadcast %cst_16 : f32 to vector<8x128xf32>
    %33 = arith.select %31, %28, %32 : vector<8x128xi1>, vector<8x128xf32>
    %cst_17 = arith.constant 0.000000e+00 : f32
    %34 = vector.broadcast %cst_17 : f32 to vector<8x128xf32>
    %35 = arith.select %31, %29, %34 : vector<8x128xi1>, vector<8x128xf32>
    %36 = arith.mulf %27, %35 : vector<8x128xf32>
    %37 = arith.addf %26, %36 : vector<8x128xf32>
    %38 = arith.mulf %27, %33 : vector<8x128xf32>
    %c124_i32 = arith.constant 124 : i32
    %39 = tpu.dynamic_rotate %38 by %c124_i32 dim 1 : vector<8x128xf32>, i32 -> vector<8x128xf32>
    %c124_i32_18 = arith.constant 124 : i32
    %40 = tpu.dynamic_rotate %37 by %c124_i32_18 dim 1 : vector<8x128xf32>, i32 -> vector<8x128xf32>
    %c124_i32_19 = arith.constant 124 : i32
    %41 = vector.broadcast %c124_i32_19 : i32 to vector<8x128xi32>
    %42 = arith.cmpi slt, %16, %41 : vector<8x128xi32>
    %cst_20 = arith.constant 1.000000e+00 : f32
    %43 = vector.broadcast %cst_20 : f32 to vector<8x128xf32>
    %44 = arith.select %42, %39, %43 : vector<8x128xi1>, vector<8x128xf32>
    %cst_21 = arith.constant 0.000000e+00 : f32
    %45 = vector.broadcast %cst_21 : f32 to vector<8x128xf32>
    %46 = arith.select %42, %40, %45 : vector<8x128xi1>, vector<8x128xf32>
    %47 = arith.mulf %38, %46 : vector<8x128xf32>
    %48 = arith.addf %37, %47 : vector<8x128xf32>
    %49 = arith.mulf %38, %44 : vector<8x128xf32>
    %c120_i32 = arith.constant 120 : i32
    %50 = tpu.dynamic_rotate %49 by %c120_i32 dim 1 : vector<8x128xf32>, i32 -> vector<8x128xf32>
    %c120_i32_22 = arith.constant 120 : i32
    %51 = tpu.dynamic_rotate %48 by %c120_i32_22 dim 1 : vector<8x128xf32>, i32 -> vector<8x128xf32>
    %c120_i32_23 = arith.constant 120 : i32
    %52 = vector.broadcast %c120_i32_23 : i32 to vector<8x128xi32>
    %53 = arith.cmpi slt, %16, %52 : vector<8x128xi32>
    %cst_24 = arith.constant 1.000000e+00 : f32
    %54 = vector.broadcast %cst_24 : f32 to vector<8x128xf32>
    %55 = arith.select %53, %50, %54 : vector<8x128xi1>, vector<8x128xf32>
    %cst_25 = arith.constant 0.000000e+00 : f32
    %56 = vector.broadcast %cst_25 : f32 to vector<8x128xf32>
    %57 = arith.select %53, %51, %56 : vector<8x128xi1>, vector<8x128xf32>
    %58 = arith.mulf %49, %57 : vector<8x128xf32>
    %59 = arith.addf %48, %58 : vector<8x128xf32>
    %60 = arith.mulf %49, %55 : vector<8x128xf32>
    %c112_i32 = arith.constant 112 : i32
    %61 = tpu.dynamic_rotate %60 by %c112_i32 dim 1 : vector<8x128xf32>, i32 -> vector<8x128xf32>
    %c112_i32_26 = arith.constant 112 : i32
    %62 = tpu.dynamic_rotate %59 by %c112_i32_26 dim 1 : vector<8x128xf32>, i32 -> vector<8x128xf32>
    %c112_i32_27 = arith.constant 112 : i32
    %63 = vector.broadcast %c112_i32_27 : i32 to vector<8x128xi32>
    %64 = arith.cmpi slt, %16, %63 : vector<8x128xi32>
    %cst_28 = arith.constant 1.000000e+00 : f32
    %65 = vector.broadcast %cst_28 : f32 to vector<8x128xf32>
    %66 = arith.select %64, %61, %65 : vector<8x128xi1>, vector<8x128xf32>
    %cst_29 = arith.constant 0.000000e+00 : f32
    %67 = vector.broadcast %cst_29 : f32 to vector<8x128xf32>
    %68 = arith.select %64, %62, %67 : vector<8x128xi1>, vector<8x128xf32>
    %69 = arith.mulf %60, %68 : vector<8x128xf32>
    %70 = arith.addf %59, %69 : vector<8x128xf32>
    %71 = arith.mulf %60, %66 : vector<8x128xf32>
    %c96_i32 = arith.constant 96 : i32
    %72 = tpu.dynamic_rotate %71 by %c96_i32 dim 1 : vector<8x128xf32>, i32 -> vector<8x128xf32>
    %c96_i32_30 = arith.constant 96 : i32
    %73 = tpu.dynamic_rotate %70 by %c96_i32_30 dim 1 : vector<8x128xf32>, i32 -> vector<8x128xf32>
    %c96_i32_31 = arith.constant 96 : i32
    %74 = vector.broadcast %c96_i32_31 : i32 to vector<8x128xi32>
    %75 = arith.cmpi slt, %16, %74 : vector<8x128xi32>
    %cst_32 = arith.constant 1.000000e+00 : f32
    %76 = vector.broadcast %cst_32 : f32 to vector<8x128xf32>
    %77 = arith.select %75, %72, %76 : vector<8x128xi1>, vector<8x128xf32>
    %cst_33 = arith.constant 0.000000e+00 : f32
    %78 = vector.broadcast %cst_33 : f32 to vector<8x128xf32>
    %79 = arith.select %75, %73, %78 : vector<8x128xi1>, vector<8x128xf32>
    %80 = arith.mulf %71, %79 : vector<8x128xf32>
    %81 = arith.addf %70, %80 : vector<8x128xf32>
    %82 = arith.mulf %71, %77 : vector<8x128xf32>
    %c64_i32 = arith.constant 64 : i32
    %83 = tpu.dynamic_rotate %82 by %c64_i32 dim 1 : vector<8x128xf32>, i32 -> vector<8x128xf32>
    %c64_i32_34 = arith.constant 64 : i32
    %84 = tpu.dynamic_rotate %81 by %c64_i32_34 dim 1 : vector<8x128xf32>, i32 -> vector<8x128xf32>
    %c64_i32_35 = arith.constant 64 : i32
    %85 = vector.broadcast %c64_i32_35 : i32 to vector<8x128xi32>
    %86 = arith.cmpi slt, %16, %85 : vector<8x128xi32>
    %cst_36 = arith.constant 1.000000e+00 : f32
    %87 = vector.broadcast %cst_36 : f32 to vector<8x128xf32>
    %88 = arith.select %86, %83, %87 : vector<8x128xi1>, vector<8x128xf32>
    %cst_37 = arith.constant 0.000000e+00 : f32
    %89 = vector.broadcast %cst_37 : f32 to vector<8x128xf32>
    %90 = arith.select %86, %84, %89 : vector<8x128xi1>, vector<8x128xf32>
    %91 = arith.mulf %82, %90 : vector<8x128xf32>
    %92 = arith.addf %81, %91 : vector<8x128xf32>
    %93 = arith.mulf %82, %88 : vector<8x128xf32>
    %c0_38 = arith.constant 0 : index
    %c0_39 = arith.constant 0 : index
    %94 = vector.load %arg8[%c0_38, %c0_39] : memref<8x1xf32, #tpu.memory_space<vmem>>, vector<8x1xf32>
    %95 = vector.broadcast %94 : vector<8x1xf32> to vector<8x128xf32>
    %96 = arith.mulf %93, %95 : vector<8x128xf32>
    %97 = arith.addf %92, %96 : vector<8x128xf32>
    %c0_40 = arith.constant 0 : index
    %c0_41 = arith.constant 0 : index
    %98 = vector.load %arg6[%c0_40, %c0_41] : memref<8x128xf32, #tpu.memory_space<vmem>>, vector<8x128xf32>
    tpu.vector_store %arg6[%c0_40, %c0_41], %97 {strides = array<i32>} : memref<8x128xf32, #tpu.memory_space<vmem>>, vector<8x128xf32>,
    %c0_42 = arith.constant 0 : index
    %c0_43 = arith.constant 0 : index
    %99 = vector.load %arg4[%c0_42, %c0_43] : memref<8x128xf32, #tpu.memory_space<vmem>>, vector<8x128xf32>
    %100 = arith.addf %97, %99 : vector<8x128xf32>
    %c0_44 = arith.constant 0 : index
    %c0_45 = arith.constant 0 : index
    %101 = vector.load %arg7[%c0_44, %c0_45] : memref<8x128xf32, #tpu.memory_space<vmem>>, vector<8x128xf32>
    tpu.vector_store %arg7[%c0_44, %c0_45], %100 {strides = array<i32>} : memref<8x128xf32, #tpu.memory_space<vmem>>, vector<8x128xf32>,
    %102 = vector.extract_strided_slice %97 {offsets = [0, 0], sizes = [8, 1], strides = [1, 1]} : vector<8x128xf32> to vector<8x1xf32>
    %c0_46 = arith.constant 0 : index
    %c0_47 = arith.constant 0 : index
    %103 = vector.load %arg8[%c0_46, %c0_47] : memref<8x1xf32, #tpu.memory_space<vmem>>, vector<8x1xf32>
    tpu.vector_store %arg8[%c0_46, %c0_47], %102 {strides = array<i32>} : memref<8x1xf32, #tpu.memory_space<vmem>>, vector<8x1xf32>,
    return
  }
  func.func @transform_0(%arg0: i32, %arg1: i32) -> (i32, i32) {
    %c0_i32 = arith.constant 0 : i32
    %0 = arith.subi %c0_i32, %arg1 : i32
    %c0_i32_0 = arith.constant 0 : i32
    return %arg0, %0 : i32, i32
  }
  func.func @transform_1(%arg0: i32, %arg1: i32) -> (i32, i32) {
    %c0_i32 = arith.constant 0 : i32
    %0 = arith.subi %c0_i32, %arg1 : i32
    %c0_i32_0 = arith.constant 0 : i32
    return %arg0, %0 : i32, i32
  }
  func.func @transform_2(%arg0: i32, %arg1: i32) -> (i32, i32) {
    %c0_i32 = arith.constant 0 : i32
    %0 = arith.subi %c0_i32, %arg1 : i32
    %c0_i32_0 = arith.constant 0 : i32
    return %arg0, %0 : i32, i32
  }
  func.func @transform_3(%arg0: i32, %arg1: i32) -> (i32, i32) {
    %c0_i32 = arith.constant 0 : i32
    %0 = arith.subi %c0_i32, %arg1 : i32
    %c0_i32_0 = arith.constant 0 : i32
    return %arg0, %0 : i32, i32
  }
  func.func @transform_4(%arg0: i32, %arg1: i32) -> (i32, i32) {
    %c0_i32 = arith.constant 0 : i32
    %0 = arith.subi %c0_i32, %arg1 : i32
    %c0_i32_0 = arith.constant 0 : i32
    return %arg0, %0 : i32, i32
  }
  func.func @transform_5(%arg0: i32, %arg1: i32) -> (i32, i32) {
    %c0_i32 = arith.constant 0 : i32
    %0 = arith.subi %c0_i32, %arg1 : i32
    %c0_i32_0 = arith.constant 0 : i32
    return %arg0, %0 : i32, i32
  }
}

</mosaic_0001>

<llo_original>
// kernel: tpu_custom_call.1
$region0: #{tpu_custom_call.1}
  #allocation0 [shape = 'u32[]', space=smem, size = 0x4, offset = 0x4, fixed_abs, tag = 'smem constant byte address 0x4 - core index']
  #allocation1 [shape = 'u32[144,128]{1,0:T(1,128)}', space=vmem, size = 0x12000, scoped, tag = 'internal scratch']
  #allocation2 [shape = 'f32[8,1]{1,0:T(8,128)}', space=vmem, size = 0x1000, scoped, tag = 'scratch operand']
  %s0 = inlined_call_operand.hbm [shape: f32[8,128], index: 0, kind: input, shape index: {}]
  %s1 = inlined_call_operand.hbm [shape: f32[8,128], index: 1, kind: input, shape index: {}]
  %s2 = inlined_call_operand.hbm [shape: f32[8,128], index: 2, kind: input, shape index: {}]
  %s3 = inlined_call_operand.vmem [shape: f32[8,128], index: 3, kind: input, shape index: {}]
  %s4 = inlined_call_operand.hbm [shape: f32[8,128], index: 4, kind: output, shape index: {0}]
  %s5 = inlined_call_operand.hbm [shape: f32[8,128], index: 5, kind: output, shape index: {1}]
  %6 = xla_tuple %s4, %s5
  %s7 = sld [smem:[#allocation0]]
  $region50: #{tpu_custom_call.1} parent=0
    _
  %s9 = ssub.s32 1, %s7
  %s10 = scalar_select 0, %s9, %s7
  $region1: #{tpu_custom_call.1} parent=0
    #allocation3 [shape = 'u8[4096]{0}', space=vmem, size = 0x1000, scoped, tag = 'input window, operand 0, single buffered']
    #allocation4 [shape = 's32[1]{0}', space=sflag, size = 0x4, scoped, tag = 'scoped memory for tpu_custom_call.1']
    #allocation5 [shape = 's32[1]{0}', space=sflag, size = 0x4, scoped, tag = 'scoped memory for tpu_custom_call.1']
    #allocation6 [shape = 'u8[4096]{0}', space=vmem, size = 0x1000, scoped, tag = 'input window, operand 1, single buffered']
    #allocation7 [shape = 's32[1]{0}', space=sflag, size = 0x4, scoped, tag = 'scoped memory for tpu_custom_call.1']
    #allocation8 [shape = 'u8[4096]{0}', space=vmem, size = 0x1000, scoped, tag = 'input window, operand 2, single buffered']
    #allocation9 [shape = 'u8[4096]{0}', space=vmem, size = 0x1000, scoped, tag = 'output window, operand 0, single buffered']
    #allocation10 [shape = 'u8[4096]{0}', space=vmem, size = 0x1000, scoped, tag = 'output window, operand 1, single buffered']
    #allocation11 [shape = 's32[1]{0}', space=sflag, size = 0x4, scoped, tag = 'scoped memory for tpu_custom_call.1']
    %11 = vsyncpa [#allocation4], 0
    %12 = vsyncpa [#allocation7], 0
    %13 = vsyncpa [#allocation5], 0
    %14 = vsyncpa [#allocation11], 0
    // Predicated region
    $region2: #{tpu_custom_call.1} parent=1 // pred_check
      _
    $region3: #{tpu_custom_call.1} parent=1 // pred_check_branch
      %16 = sbr.rel (0) target = $region5
    $region4: #{tpu_custom_call.1} parent=1 // pred_region
      %s17 = ssub.s32 0, 0
      %s19 = ssub.s32 128, 128
      %20 = vsyncadd [#allocation4], %s19
      %s21 = smul.addr %s17, 128
      %s22 = scalar_lea.hbm %s0, %s21
      %s24 = sshll.u32 [#allocation3], 4
      %s25 = int_to_ptr.vmem [resolvable:$true] %s24
      %27 = dma.hbm_to_vmem [thread:$0]  %s22, 128, %s25, [#allocation4]
    $region5: #{tpu_custom_call.1} parent=1 // pred_fallthru
      _
    // Predicated region
    $region6: #{tpu_custom_call.1} parent=1 // pred_check
      _
    $region7: #{tpu_custom_call.1} parent=1 // pred_check_branch
      %29 = sbr.rel (0) target = $region9
    $region8: #{tpu_custom_call.1} parent=1 // pred_region
      %s30 = ssub.s32 0, 0
      %s32 = ssub.s32 128, 128
      %33 = vsyncadd [#allocation7], %s32
      %s34 = smul.addr %s30, 128
      %s35 = scalar_lea.hbm %s1, %s34
      %s37 = sshll.u32 [#allocation6], 4
      %s38 = int_to_ptr.vmem [resolvable:$true] %s37
      %40 = dma.hbm_to_vmem [thread:$0]  %s35, 128, %s38, [#allocation7]
    $region9: #{tpu_custom_call.1} parent=1 // pred_fallthru
      _
    // Predicated region
    $region10: #{tpu_custom_call.1} parent=1 // pred_check
      _
    $region11: #{tpu_custom_call.1} parent=1 // pred_check_branch
      %42 = sbr.rel (0) target = $region13
    $region12: #{tpu_custom_call.1} parent=1 // pred_region
      %s43 = ssub.s32 0, 0
      %s45 = ssub.s32 128, 128
      %46 = vsyncadd [#allocation7], %s45
      %s47 = smul.addr %s43, 128
      %s48 = scalar_lea.hbm %s2, %s47
      %s50 = sshll.u32 [#allocation8], 4
      %s51 = int_to_ptr.vmem [resolvable:$true] %s50
      %53 = dma.hbm_to_vmem [thread:$0]  %s48, 128, %s51, [#allocation7]
    $region13: #{tpu_custom_call.1} parent=1 // pred_fallthru
      _
    // Predicated region
    $region14: #{tpu_custom_call.1} parent=1 // pred_check
      _
    $region15: #{tpu_custom_call.1} parent=1 // pred_check_branch
      %55 = sbr.rel (0) target = $region17
    $region16: #{tpu_custom_call.1} parent=1 // pred_region
      %s56 = ssub.s32 0, 0
      %p57 = scmp.lt.s32.totalorder %s56, 0
      %s58 = scalar_select %p57, %s56, 0
      %s59 = smul.addr %s58, 8
      %s60 = scalar_lea.vmem %s3, %s59
      %s61 = ssub.s32 0, 0
    $region17: #{tpu_custom_call.1} parent=1 // pred_fallthru
      _
    // Predicated region
    $region18: #{tpu_custom_call.1} parent=1 // pred_check
      _
    $region19: #{tpu_custom_call.1} parent=1 // pred_check_branch
      %63 = sbr.rel (0) target = $region21
    $region20: #{tpu_custom_call.1} parent=1 // pred_region
      %64 = dma.done [#allocation4], 128
    $region21: #{tpu_custom_call.1} parent=1 // pred_fallthru
      _
    // Predicated region
    $region22: #{tpu_custom_call.1} parent=1 // pred_check
      _
    $region23: #{tpu_custom_call.1} parent=1 // pred_check_branch
      %66 = sbr.rel (0) target = $region25
    $region24: #{tpu_custom_call.1} parent=1 // pred_region
      %67 = dma.done [#allocation7], 128
    $region25: #{tpu_custom_call.1} parent=1 // pred_fallthru
      _
    // Predicated region
    $region26: #{tpu_custom_call.1} parent=1 // pred_check
      _
    $region27: #{tpu_custom_call.1} parent=1 // pred_check_branch
      %69 = sbr.rel (0) target = $region29
    $region28: #{tpu_custom_call.1} parent=1 // pred_region
      %70 = dma.done [#allocation7], 128
    $region29: #{tpu_custom_call.1} parent=1 // pred_fallthru
      _
    %s71 = ssub.s32 0, 0
    %p72 = scmp.lt.s32.totalorder %s71, 0
    %s73 = scalar_select %p72, %s71, 0
    %s74 = smul.addr %s73, 8
    %s75 = scalar_lea.vmem %s3, %s74
    %s76 = ssub.s32 0, 0
    %s77 = ssub.s32 0, 0
    %s78 = ssub.s32 0, 0
    %s79 = ssub.s32 0, 0
    %p80 = scmp.lt.s32.totalorder %s79, 0
    %s81 = scalar_select %p80, %s79, 0
    %s82 = smul.addr %s81, 8
    %s83 = scalar_lea.vmem %s3, %s82
    %s84 = ssub.s32 0, 0
    %s85 = ssub.s32 0, 0
    %s86 = ssub.s32 0, 0
    %p87 = scmp.eq.s32.totalorder 0, 0
    // Predicated region
    $region30: #{tpu_custom_call.1} parent=1 // pred_check
      %p88 = pneg %p87
    $region31: #{tpu_custom_call.1} parent=1 // pred_check_branch
      %90 = sbr.rel (%p88) target = $region33
    $region32: #{tpu_custom_call.1} parent=1 // pred_region
      %vm91 = vcmask 7168
      %92 = vst.msk [vmem:[#allocation2] sm:$0xff] %vm91, 0.0
    $region33: #{tpu_custom_call.1} parent=1 // pred_fallthru
      _
    %v93 = vld [vmem:[#allocation6] sm:$0xff]
    %v94 = vsub.f32 1.0, %v93
    %v95 = vmul.f32 %v94, 0.9405
    %v96 = vld [vmem:[#allocation3] sm:$0xff]
    %v97 = vld [vmem:[%s83] sm:$0xff]
    %v98 = vmul.f32 %v97, 0.99
    %v99 = vmul.f32 %v98, %v94
    %v100 = vadd.f32 %v96, %v99
    %v101 = vld [vmem:[#allocation8] sm:$0xff]
    %v102 = vsub.f32 %v100, %v101
    %v103 = vlaneseq
    %v104 = vand.u32 %v103, 127
    %105 = vrot.lane.b32.xlu0 %v95, 127
    %v106 = vpop.permute.xlu0 %105
    %107 = vrot.lane.b32.xlu0 %v102, 127
    %v108 = vpop.permute.xlu0 %107
    %vm109 = vcmp.lt.s32.totalorder %v104, 127
    %v110 = vsel %vm109, %v106, 1.0
    %v111 = vsel %vm109, %v108, 0.0
    %v112 = vmul.f32 %v95, %v111
    %v113 = vadd.f32 %v102, %v112
    %v114 = vmul.f32 %v95, %v110
    %115 = vrot.lane.b32.xlu0 %v114, 126
    %v116 = vpop.permute.xlu0 %115
    %117 = vrot.lane.b32.xlu0 %v113, 126
    %v118 = vpop.permute.xlu0 %117
    %vm119 = vcmp.lt.s32.totalorder %v104, 126
    %v120 = vsel %vm119, %v116, 1.0
    %v121 = vsel %vm119, %v118, 0.0
    %v122 = vmul.f32 %v114, %v121
    %v123 = vadd.f32 %v113, %v122
    %v124 = vmul.f32 %v114, %v120
    %125 = vrot.lane.b32.xlu0 %v124, 124
    %v126 = vpop.permute.xlu0 %125
    %127 = vrot.lane.b32.xlu0 %v123, 124
    %v128 = vpop.permute.xlu0 %127
    %vm129 = vcmp.lt.s32.totalorder %v104, 124
    %v130 = vsel %vm129, %v126, 1.0
    %v131 = vsel %vm129, %v128, 0.0
    %v132 = vmul.f32 %v124, %v131
    %v133 = vadd.f32 %v123, %v132
    %v134 = vmul.f32 %v124, %v130
    %135 = vrot.lane.b32.xlu0 %v134, 120
    %v136 = vpop.permute.xlu0 %135
    %137 = vrot.lane.b32.xlu0 %v133, 120
    %v138 = vpop.permute.xlu0 %137
    %vm139 = vcmp.lt.s32.totalorder %v104, 120
    %v140 = vsel %vm139, %v136, 1.0
    %v141 = vsel %vm139, %v138, 0.0
    %v142 = vmul.f32 %v134, %v141
    %v143 = vadd.f32 %v133, %v142
    %v144 = vmul.f32 %v134, %v140
    %145 = vrot.lane.b32.xlu0 %v144, 112
    %v146 = vpop.permute.xlu0 %145
    %147 = vrot.lane.b32.xlu0 %v143, 112
    %v148 = vpop.permute.xlu0 %147
    %vm149 = vcmp.lt.s32.totalorder %v104, 112
    %v150 = vsel %vm149, %v146, 1.0
    %v151 = vsel %vm149, %v148, 0.0
    %v152 = vmul.f32 %v144, %v151
    %v153 = vadd.f32 %v143, %v152
    %v154 = vmul.f32 %v144, %v150
    %155 = vrot.lane.b32.xlu0 %v154, 96
    %v156 = vpop.permute.xlu0 %155
    %157 = vrot.lane.b32.xlu0 %v153, 96
    %v158 = vpop.permute.xlu0 %157
    %vm159 = vcmp.lt.s32.totalorder %v104, 96
    %v160 = vsel %vm159, %v156, 1.0
    %v161 = vsel %vm159, %v158, 0.0
    %v162 = vmul.f32 %v154, %v161
    %v163 = vadd.f32 %v153, %v162
    %v164 = vmul.f32 %v154, %v160
    %165 = vrot.lane.b32.xlu0 %v164, 64
    %v166 = vpop.permute.xlu0 %165
    %167 = vrot.lane.b32.xlu0 %v163, 64
    %v168 = vpop.permute.xlu0 %167
    %vm169 = vcmp.lt.s32.totalorder %v104, 64
    %v170 = vsel %vm169, %v166, 1.0
    %v171 = vsel %vm169, %v168, 0.0
    %v172 = vmul.f32 %v164, %v171
    %v173 = vadd.f32 %v163, %v172
    %v174 = vmul.f32 %v164, %v170
    %v175 = vld [vmem:[#allocation2] sm:$0xff]
    %177 = vset.pattern.permute.xlu0 0
    %178 = vperm.xlu0 %177, %v175
    %v179 = vpop.permute.xlu0 %178
    %v181 = vmul.f32 %v174, %v179
    %v182 = vadd.f32 %v173, %v181
    %183 = vst [vmem:[#allocation9] sm:$0xff] %v182
    %v184 = vld [vmem:[#allocation8] sm:$0xff]
    %v185 = vadd.f32 %v182, %v184
    %186 = vst [vmem:[#allocation10] sm:$0xff] %v185
    %vm187 = vcmask 7168
    %188 = vst.msk [vmem:[#allocation2] sm:$0xff] %vm187, %v182
    // Predicated region
    $region34: #{tpu_custom_call.1} parent=1 // pred_check
      _
    $region35: #{tpu_custom_call.1} parent=1 // pred_check_branch
      %190 = sbr.rel (0) target = $region37
    $region36: #{tpu_custom_call.1} parent=1 // pred_region
      %s191 = ssub.s32 0, 0
      %s193 = ssub.s32 128, 128
      %194 = vsyncadd [#allocation5], %s193
      %s195 = smul.addr %s191, 128
      %s196 = scalar_lea.hbm %s4, %s195
      %s198 = sshll.u32 [#allocation9], 4
      %s199 = int_to_ptr.vmem [resolvable:$true] %s198
      %201 = dma.vmem_to_hbm [thread:$0]  %s199, 128, %s196, [#allocation5]
    $region37: #{tpu_custom_call.1} parent=1 // pred_fallthru
      _
    // Predicated region
    $region38: #{tpu_custom_call.1} parent=1 // pred_check
      _
    $region39: #{tpu_custom_call.1} parent=1 // pred_check_branch
      %203 = sbr.rel (0) target = $region41
    $region40: #{tpu_custom_call.1} parent=1 // pred_region
      %s204 = ssub.s32 0, 0
      %s206 = ssub.s32 128, 128
      %207 = vsyncadd [#allocation11], %s206
      %s208 = smul.addr %s204, 128
      %s209 = scalar_lea.hbm %s5, %s208
      %s211 = sshll.u32 [#allocation10], 4
      %s212 = int_to_ptr.vmem [resolvable:$true] %s211
      %214 = dma.vmem_to_hbm [thread:$0]  %s212, 128, %s209, [#allocation11]
    $region41: #{tpu_custom_call.1} parent=1 // pred_fallthru
      _
    // Predicated region
    $region42: #{tpu_custom_call.1} parent=1 // pred_check
      _
    $region43: #{tpu_custom_call.1} parent=1 // pred_check_branch
      %216 = sbr.rel (0) target = $region45
    $region44: #{tpu_custom_call.1} parent=1 // pred_region
      %217 = dma.done [#allocation5], 128
    $region45: #{tpu_custom_call.1} parent=1 // pred_fallthru
      _
    // Predicated region
    $region46: #{tpu_custom_call.1} parent=1 // pred_check
      _
    $region47: #{tpu_custom_call.1} parent=1 // pred_check_branch
      %219 = sbr.rel (0) target = $region49
    $region48: #{tpu_custom_call.1} parent=1 // pred_region
      %220 = dma.done [#allocation11], 128
    $region49: #{tpu_custom_call.1} parent=1 // pred_fallthru
      _
    %221 = vsyncpa [#allocation4], 1
    %222 = vsyncpa [#allocation7], 1
    %223 = vsyncpa [#allocation5], 1
    %224 = vsyncpa [#allocation11], 1

</llo_original>
